<compile_context>
chip_gen: v7x
topology: tpu7x:2x2x1
jax: 0.10.0
libtpu: 0.0.40
codegen_flags: <defaults>
</compile_context>

<pallas_src>
import jax
import jax.numpy as jnp
from jax.experimental import pallas as pl
from jax.experimental.pallas import tpu as pltpu

LANE = 128
SUBLANE = 8
ALIGN = SUBLANE * LANE                    # 1024 elements = one f32 vreg
DEFAULT_BLOCK_BYTES = 4 * 1024 * 1024     # ~4 MiB of HBM per grid step


def _ceil_div(a, b):
    return -(-a // b)


def _num_tensorcores():
    """Best-effort TensorCore count (2 on v7x-style megacore chips)."""
    try:
        info = pltpu.get_tpu_info()
        for name in ("num_cores", "core_count", "num_tensorcores",
                     "tensorcore_count", "cores_per_chip", "num_cores_per_chip"):
            v = getattr(info, name, None)
            if isinstance(v, int) and 1 <= v <= 16:
                return min(v, 2)
    except Exception:
        pass
    # Unknown: keep the 2-way split.  With the pl.when-gated mask the cost on
    # a single-TC chip is at most one duplicated (masked-to-zero) tile of DMA.
    return 2


def _make_sum_kernel(rows, rt, tiles_per_core, acc_rows, last_full, grid_tiles):
    """Partial-sum kernel; all sizing is baked statically.

    o_ref is an (acc_rows, LANE) f32 block resident per core across the whole
    reduction axis; acc_rows=64 gives 8 independent vadd chains per tile.
    """
    groups = rt // acc_rows

    def kernel(x_ref, o_ref):
        c = pl.program_id(0)              # core axis ("parallel")
        t = pl.program_id(1)              # row-tile axis ("arbitrary")

        @pl.when(t == 0)
        def _():
            o_ref[...] = jnp.zeros_like(o_ref)

        g = c * tiles_per_core + t        # global tile index

        def unmasked():
            # Steady state: pure load + add.  The reshape keeps the last two
            # dims (acc_rows, LANE) intact, so the reduce streams straight
            # from the input block onto 8 accumulator vregs.
            x = x_ref[...].astype(jnp.float32)
            o_ref[...] += x.reshape(groups, acc_rows, LANE).sum(axis=0)

        def masked():
            # Cold path: ragged boundary tile / clamped duplicate tile only.
            # Chunked so the iota/select temporaries stay tiny.
            base = g * rt

            @pl.loop(0, groups)
            def _(i):
                start = pl.multiple_of(i * acc_rows, acc_rows)
                xg = x_ref[pl.ds(start, acc_rows), :].astype(jnp.float32)
                rid = base + start + jax.lax.broadcasted_iota(
                    jnp.int32, (acc_rows, LANE), 0)
                o_ref[...] += jnp.where(rid < rows, xg, 0.0)

        if last_full >= grid_tiles:       # every grid tile is full & unique
            unmasked()
        elif last_full == 0:              # single (ragged) tile
            masked()
        else:
            pl.when(g < last_full)(unmasked)
            pl.when(g >= last_full)(masked)

    return kernel


def identi_loss(y_true, *, block_bytes=DEFAULT_BLOCK_BYTES):
    """Mean of y_true via a Pallas TPU streaming reduction. Returns f32 scalar."""
    n_elems = y_true.size
    flat = jnp.ravel(y_true)                       # contiguous: free reshape
    itemsize = jnp.dtype(flat.dtype).itemsize

    # (8*128)-aligned prefix goes through the kernel; the <=1023-element tail
    # is summed outside.  No padded copy of the whole input.
    n_main = n_elems - (n_elems % ALIGN)
    tail_sum = jnp.float32(0.0)
    if n_main != n_elems:
        tail_sum = jnp.sum(flat[n_main:].astype(jnp.float32))
    if n_main == 0:
        return tail_sum * jnp.float32(1.0 / n_elems)

    main = flat if n_main == n_elems else flat[:n_main]
    rows = n_main // LANE                          # multiple of 8 by construction
    x2d = main.reshape(rows, LANE)

    # Dtype-aware row tile: ~block_bytes of HBM per grid step (bf16 gets 2x the
    # rows of f32).  With default double buffering this is ~2*block_bytes of
    # VMEM -- safe under v5e's 16 MiB and v7x's 32 MiB scoped defaults.
    bytes_per_row = LANE * itemsize
    rt_target = max(SUBLANE, block_bytes // bytes_per_row)
    if rows <= rt_target:
        rt = rows
    else:
        # Multiple of 64: covers every dtype's sublane packing (8/16/32) and
        # keeps the wide-accumulator reshape exact.
        rt = min(rows, max(64, (rt_target // 64) * 64))

    # Widest accumulator block that divides the tile: 64 rows = 8 vreg chains.
    acc_rows = next(a for a in (64, 32, 16, SUBLANE) if rt % a == 0)

    total_tiles = _ceil_div(rows, rt)
    ragged = (rows % rt) != 0
    cores = min(_num_tensorcores(), total_tiles)
    tiles_per_core = _ceil_div(total_tiles, cores)
    grid_tiles = cores * tiles_per_core
    last_full = total_tiles - 1 if ragged else total_tiles

    def x_index_map(c, t):
        g = c * tiles_per_core + t
        # Clamp duplicated tail tiles to a valid block index; their
        # contribution is masked to zero inside the kernel.
        return (jnp.minimum(g, total_tiles - 1), 0)

    partials = pl.pallas_call(
        _make_sum_kernel(rows, rt, tiles_per_core, acc_rows, last_full,
                         grid_tiles),
        out_shape=jax.ShapeDtypeStruct((cores * acc_rows, LANE), jnp.float32),
        grid=(cores, tiles_per_core),
        in_specs=[pl.BlockSpec((rt, LANE), x_index_map)],
        out_specs=pl.BlockSpec((acc_rows, LANE), lambda c, t: (c, 0)),
        compiler_params=pltpu.CompilerParams(
            dimension_semantics=("parallel", "arbitrary")),
    )(x2d)

    # Tiny epilogue outside the kernel: one cross-lane reduce of the per-core
    # partials + the tail, and the exact 1/N (computed in host double).
    total = jnp.sum(partials) + tail_sum
    return total * jnp.float32(1.0 / n_elems)


if __name__ == "__main__":
    key = jax.random.PRNGKey(0)
    # Small NCHW tensor consistent with the module's forward (any shape works).
    y_true = jax.random.normal(key, (2, 4, 16, 16), dtype=jnp.float32)

    loss = jax.jit(identi_loss)(y_true)
    jax.block_until_ready(loss)

    ref = jnp.mean(y_true)
    assert jnp.allclose(loss, ref, atol=1e-6, rtol=1e-6), (loss, ref)
    print("KERNEL_OK")
</pallas_src>

<mosaic_0001>
module attributes {stable_mosaic.version = 11 : i64} {
  func.func @kernel(%arg0: i32, %arg1: i32, %arg2: memref<16x128xf32, #tpu.memory_space<vmem>>, %arg3: memref<16x128xf32, #tpu.memory_space<vmem>>) attributes {dimension_semantics = [#tpu.dimension_semantics<parallel>, #tpu.dimension_semantics<arbitrary>], iteration_bounds = array<i64: 1, 1>, scalar_prefetch = 0 : i64, scratch_operands = 0 : i64, tpu.core_type = #tpu.core_type<tc>, window_params = [{transform_indices = @transform_0, window_bounds = array<i64: 16, 128>}, {transform_indices = @transform_1, window_bounds = array<i64: 16, 128>}]} {
    %c0_i32 = arith.constant 0 : i32
    %0 = arith.cmpi eq, %arg1, %c0_i32 : i32
    %1 = arith.extui %0 : i1 to i32
    %c0_i32_0 = arith.constant 0 : i32
    %2 = arith.cmpi ne, %1, %c0_i32_0 : i32
    scf.if %2 {
      %cst_6 = arith.constant 0.000000e+00 : f32
      %9 = vector.broadcast %cst_6 : f32 to vector<16x128xf32>
      %c0_7 = arith.constant 0 : index
      %c0_8 = arith.constant 0 : index
      %10 = vector.load %arg3[%c0_7, %c0_8] : memref<16x128xf32, #tpu.memory_space<vmem>>, vector<16x128xf32>
      tpu.vector_store %arg3[%c0_7, %c0_8], %9 {strides = array<i32>} : memref<16x128xf32, #tpu.memory_space<vmem>>, vector<16x128xf32>,
    } else {
    }
    %c0 = arith.constant 0 : index
    %c0_1 = arith.constant 0 : index
    %3 = vector.load %arg2[%c0, %c0_1] : memref<16x128xf32, #tpu.memory_space<vmem>>, vector<16x128xf32>
    %c0_2 = arith.constant 0 : index
    %c0_3 = arith.constant 0 : index
    %4 = vector.load %arg3[%c0_2, %c0_3] : memref<16x128xf32, #tpu.memory_space<vmem>>, vector<16x128xf32>
    %5 = vector.shape_cast %3 : vector<16x128xf32> to vector<1x16x128xf32>
    %cst = arith.constant dense<0.000000e+00> : vector<16x128xf32>
    %6 = vector.multi_reduction <add>, %5, %cst [0] : vector<1x16x128xf32> to vector<16x128xf32>
    %7 = arith.addf %4, %6 : vector<16x128xf32>
    %c0_4 = arith.constant 0 : index
    %c0_5 = arith.constant 0 : index
    %8 = vector.load %arg3[%c0_4, %c0_5] : memref<16x128xf32, #tpu.memory_space<vmem>>, vector<16x128xf32>
    tpu.vector_store %arg3[%c0_4, %c0_5], %7 {strides = array<i32>} : memref<16x128xf32, #tpu.memory_space<vmem>>, vector<16x128xf32>,
    return
  }
  func.func @transform_0(%arg0: i32, %arg1: i32) -> (i32, i32) {
    %c1_i32 = arith.constant 1 : i32
    %0 = arith.muli %arg0, %c1_i32 : i32
    %1 = arith.addi %0, %arg1 : i32
    %c0_i32 = arith.constant 0 : i32
    %2 = arith.minsi %1, %c0_i32 : i32
    %c0_i32_0 = arith.constant 0 : i32
    %c0_i32_1 = arith.constant 0 : i32
    return %2, %c0_i32_0 : i32, i32
  }
  func.func @transform_1(%arg0: i32, %arg1: i32) -> (i32, i32) {
    %c0_i32 = arith.constant 0 : i32
    %c0_i32_0 = arith.constant 0 : i32
    return %arg0, %c0_i32 : i32, i32
  }
}

</mosaic_0001>

<llo_original>
// kernel: identi_loss.1
$region0: #{identi_loss.1}
  #allocation0 [shape = 'u32[]', space=smem, size = 0x4, offset = 0x4, fixed_abs, tag = 'smem constant byte address 0x4 - core index']
  #allocation1 [shape = 'u32[144,128]{1,0:T(1,128)}', space=vmem, size = 0x12000, scoped, tag = 'internal scratch']
  %s0 = inlined_call_operand.vmem [shape: f32[16,128], index: 0, kind: input, shape index: {}]
  %s1 = inlined_call_operand.vmem [shape: f32[16,128], index: 1, kind: output, shape index: {}]
  %s2 = sld [smem:[#allocation0]]
  $region18: #{identi_loss.1} parent=0
    _
  %s4 = ssub.s32 1, %s2
  %s5 = scalar_select 0, %s4, %s2
  // Predicated region
  $region2: #{identi_loss.1} parent=0 // pred_check
    _
  $region3: #{identi_loss.1} parent=0 // pred_check_branch
    %7 = sbr.rel (0) target = $region5
  $region4: #{identi_loss.1} parent=0 // pred_region
    %s8 = sadd.s32 0, 0
    %p9 = scmp.lt.s32.totalorder %s8, 0
    %s10 = scalar_select %p9, %s8, 0
    %s11 = smul.u32 2, %s10
    %p12 = scmp.lt.s32.totalorder %s11, 1
    %s13 = scalar_select %p12, %s11, 1
    %s14 = smul.addr %s13, 8
    %s15 = scalar_lea.vmem %s0, %s14
    %s16 = sadd.s32 0, 0
    %p17 = scmp.lt.s32.totalorder %s16, 0
    %s18 = scalar_select %p17, %s16, 0
    %s19 = smul.u32 2, %s18
  $region5: #{identi_loss.1} parent=0 // pred_fallthru
    _
  %s20 = sadd.s32 0, 0
  %p21 = scmp.lt.s32.totalorder %s20, 0
  %s22 = scalar_select %p21, %s20, 0
  %s23 = smul.u32 2, %s22
  %p24 = scmp.lt.s32.totalorder %s23, 1
  %s25 = scalar_select %p24, %s23, 1
  %s26 = smul.addr %s25, 8
  %s27 = scalar_lea.vmem %s0, %s26
  %s28 = sadd.s32 0, 0
  %p29 = scmp.lt.s32.totalorder %s28, 0
  %s30 = scalar_select %p29, %s28, 0
  %s31 = smul.u32 2, %s30
  %p32 = scmp.lt.s32.totalorder %s31, 1
  %s33 = scalar_select %p32, %s31, 1
  %s34 = smul.addr %s33, 8
  %s35 = scalar_lea.vmem %s0, %s34
  %s36 = sadd.s32 0, 0
  %p37 = scmp.lt.s32.totalorder %s36, 0
  %s38 = scalar_select %p37, %s36, 0
  %s39 = smul.u32 2, %s38
  %p40 = scmp.eq.s32.totalorder 0, 0
  // Predicated region
  $region6: #{identi_loss.1} parent=0 // pred_check
    %p41 = pneg %p40
  $region7: #{identi_loss.1} parent=0 // pred_check_branch
    %43 = sbr.rel (%p41) target = $region9
  $region8: #{identi_loss.1} parent=0 // pred_region
    %44 = vst [vmem:[%s1] sm:$0xff] 0.0
    %45 = vst [vmem:[%s1 + $0x8] sm:$0xff] 0.0
  $region9: #{identi_loss.1} parent=0 // pred_fallthru
    _
  %v46 = vld [vmem:[%s35] sm:$0xff]
  %v47 = vld [vmem:[%s35 + $0x8] sm:$0xff]
  %v48 = vld [vmem:[%s1] sm:$0xff]
  %v49 = vld [vmem:[%s1 + $0x8] sm:$0xff]
  %v50 = vadd.f32 %v46, 0.0
  %v51 = vadd.f32 %v47, 0.0
  %v52 = vadd.f32 %v48, %v50
  %v53 = vadd.f32 %v49, %v51
  %54 = vst [vmem:[%s1] sm:$0xff] %v52
  %55 = vst [vmem:[%s1 + $0x8] sm:$0xff] %v53
  // Predicated region
  $region10: #{identi_loss.1} parent=0 // pred_check
    _
  $region11: #{identi_loss.1} parent=0 // pred_check_branch
    %57 = sbr.rel (0) target = $region13
  $region12: #{identi_loss.1} parent=0 // pred_region
    _
  $region13: #{identi_loss.1} parent=0 // pred_fallthru
    _
  // Predicated region
  $region14: #{identi_loss.1} parent=0 // pred_check
    _
  $region15: #{identi_loss.1} parent=0 // pred_check_branch
    %59 = sbr.rel (0) target = $region17
  $region16: #{identi_loss.1} parent=0 // pred_region
    _
  $region17: #{identi_loss.1} parent=0 // pred_fallthru
    _

</llo_original>
